<compile_context>
chip_gen: v5e
topology: v5e:2x2
jax: 0.10.0
libtpu: 0.0.40
codegen_flags: <defaults>
</compile_context>

<pallas_src>
import functools
import math

import jax
import jax.numpy as jnp
from jax.experimental import pallas as pl
from jax.experimental.pallas import tpu as pltpu


# ----------------------------------------------------------------------------
# Pallas kernel: 3 MXU matmuls (bf16 in / f32 acc) + ReLUs + dueling combine +
# per-action (64-lane-packed) softmax for one batch tile.
# ----------------------------------------------------------------------------
def qnet_kernel(n_actions, x_ref, w1_ref, wh_ref, bh_ref, wo_ref, bo_ref, out_ref):
    HALF, BLK = 64, 128
    n_pairs = (n_actions + 1) // 2

    # Layer 1: fused pos/orient/view nets (block-diag weight, bias folded).   MXU #1
    x = x_ref[...].astype(jnp.bfloat16)                              # [TB, 7]
    feat = jnp.dot(x, w1_ref[...], preferred_element_type=jnp.float32)
    feat = jnp.maximum(feat, 0.0)                                    # [TB, 128] f32

    # Fused advantage/value hidden layer + ReLU (bias added in f32).          MXU #2
    h = jnp.dot(feat.astype(jnp.bfloat16), wh_ref[...],
                preferred_element_type=jnp.float32) + bh_ref[...]
    h = jnp.maximum(h, 0.0)                                          # [TB, 256] f32

    # Fused block-diagonal output layer.                                      MXU #3
    # z = [pair_0 | pair_1 | ... | value], 128 lanes each. Pair block p holds
    # action 2p in lanes 0:64 and action 2p+1 in lanes 64:128 (atoms padded
    # 51->64 with exact zeros). The value block holds value in lanes 0:51,
    # -1e30 bias in lanes 51:64 (softmax killer) and exact zeros in 64:128.
    z = jnp.dot(h.astype(jnp.bfloat16), wo_ref[...],
                preferred_element_type=jnp.float32) + bo_ref[...]

    # value and mean(adv), broadcast to both 64-lane halves via an XLU rotate.
    val = z[:, n_pairs * BLK:(n_pairs + 1) * BLK]
    val_both = val + pltpu.roll(val, shift=HALF, axis=1)
    adv_sum = z[:, 0:BLK]
    for p in range(1, n_pairs):
        adv_sum = adv_sum + z[:, p * BLK:(p + 1) * BLK]
    adv_sum_both = adv_sum + pltpu.roll(adv_sum, shift=HALF, axis=1)
    base = val_both - adv_sum_both * (1.0 / n_actions)               # value - mean(adv)

    # Segmented (per 64-lane half) softmax over atoms; mask hoisted out of the loop.
    lane = jax.lax.broadcasted_iota(jnp.int32, (1, BLK), 1)
    left = lane < HALF
    neg = jnp.float32(-1e30)

    results = []
    for p in range(n_pairs):
        q = base + z[:, p * BLK:(p + 1) * BLK]                       # [TB, 128]
        m_l = jnp.max(jnp.where(left, q, neg), axis=-1, keepdims=True)
        m_r = jnp.max(jnp.where(left, neg, q), axis=-1, keepdims=True)
        e = jnp.exp(q - jnp.where(left, m_l, m_r))                   # pad lanes -> exp(-1e30)=0
        s_l = jnp.sum(jnp.where(left, e, 0.0), axis=-1, keepdims=True)
        s_r = jnp.sum(jnp.where(left, 0.0, e), axis=-1, keepdims=True)
        inv = jnp.where(left, pl.reciprocal(s_l, approx=False),
                        pl.reciprocal(s_r, approx=False))            # exact; [TB,1] operands
        results.append(e * inv)

    # Full 128-lane unmasked stores, issued back-to-back (v5e: single vst slot).
    for p in range(n_pairs):
        out_ref[:, p * BLK:(p + 1) * BLK] = results[p]


# ----------------------------------------------------------------------------
# Parameter construction (deterministic, in-script).
# ----------------------------------------------------------------------------
def _scale_noise(key, size):
    x = jax.random.normal(key, (size,), dtype=jnp.float32)
    return jnp.sign(x) * jnp.sqrt(jnp.abs(x))


def noisy_linear_params(key, in_f, out_f, std_init=0.5, training=True):
    """Effective (W[in,out], b[out]) of a NoisyLinear in training mode."""
    k1, k2, k3, k4 = jax.random.split(key, 4)
    mu_range = 1.0 / math.sqrt(in_f)
    w_mu = jax.random.uniform(k1, (out_f, in_f), jnp.float32, -mu_range, mu_range)
    b_mu = jax.random.uniform(k2, (out_f,), jnp.float32, -mu_range, mu_range)
    w_sigma = jnp.full((out_f, in_f), std_init / math.sqrt(in_f), jnp.float32)
    b_sigma = jnp.full((out_f,), std_init / math.sqrt(out_f), jnp.float32)
    eps_in = _scale_noise(k3, in_f)
    eps_out = _scale_noise(k4, out_f)
    if training:
        w_eff = w_mu + w_sigma * jnp.outer(eps_out, eps_in)
        b_eff = b_mu + b_sigma * eps_out
    else:
        w_eff, b_eff = w_mu, b_mu
    return w_eff.T, b_eff  # stored as [in, out]


def linear_params(key, in_f, out_f, std=math.sqrt(2)):
    """layer_init: orthogonal weight (gain=std), zero bias. Returns W[in,out], b[out]."""
    w = jax.nn.initializers.orthogonal(std)(key, (out_f, in_f), jnp.float32)
    b = jnp.zeros((out_f,), jnp.float32)
    return w.T, b


def build_params(key, n_actions, n_atoms, combined=128, training=True):
    """Raw (un-fused) parameters, used by the pure-JAX references."""
    ks = jax.random.split(key, 7)
    w_pos, b_pos = linear_params(ks[0], 2, 64)
    w_ori, b_ori = linear_params(ks[1], 1, 32)
    w_view, b_view = linear_params(ks[2], 3, 32)

    # Block-diagonal fused first layer: input layout [pos(2) | orient(1) | view(3)].
    w1 = jnp.zeros((6, combined), jnp.float32)
    w1 = w1.at[0:2, 0:64].set(w_pos)
    w1 = w1.at[2:3, 64:96].set(w_ori)
    w1 = w1.at[3:6, 96:128].set(w_view)
    b1 = jnp.concatenate([b_pos, b_ori, b_view])

    w_ah, b_ah = noisy_linear_params(ks[3], combined, 128, training=training)
    w_a, b_a = noisy_linear_params(ks[4], 128, n_actions * n_atoms, training=training)
    w_vh, b_vh = noisy_linear_params(ks[5], combined, 128, training=training)
    w_v, b_v = noisy_linear_params(ks[6], 128, n_atoms, training=training)

    return dict(w1=w1, b1=b1, w_ah=w_ah, b_ah=b_ah, w_a=w_a, b_a=b_a,
                w_vh=w_vh, b_vh=b_vh, w_v=w_v, b_v=b_v)


def pack_params(p, n_actions, n_atoms):
    """Fuse / lane-pack the raw parameters into the kernel layout.

    MXU operands (w1 / w_h / w_out) are stored bf16; biases stay f32 (the -1e30
    pad-atom softmax killer lives in the f32 value bias).
    """
    HALF, BLK = 64, 128
    assert n_atoms <= HALF, "atom block must fit a 64-lane half-block"
    A, N = n_actions, n_atoms
    n_pairs = (A + 1) // 2

    # First layer: fold bias via an appended ones column -> [7, 128].
    w1_aug = jnp.concatenate([p["w1"], p["b1"][None, :]], axis=0)

    # Fused hidden layer: [128, 256] = [adv_hidden | value_hidden].
    w_h = jnp.concatenate([p["w_ah"], p["w_vh"]], axis=1)
    b_h = jnp.concatenate([p["b_ah"], p["b_vh"]])[None, :]

    # Fused block-diagonal output layer: [256, (n_pairs+1)*128].
    #   action a -> columns a*64 .. a*64+N  (== pair block a//2, half a%2)
    #   value    -> last block, lanes 0:N; lanes N:64 biased -1e30; lanes 64:128
    #              exactly 0 so the in-kernel roll broadcasts value to both halves.
    z_w = (n_pairs + 1) * BLK
    w_out = jnp.zeros((2 * BLK, z_w), jnp.float32)
    b_out = jnp.zeros((z_w,), jnp.float32)
    for a in range(A):
        col = a * HALF
        w_out = w_out.at[0:BLK, col:col + N].set(p["w_a"][:, a * N:(a + 1) * N])
        b_out = b_out.at[col:col + N].set(p["b_a"][a * N:(a + 1) * N])
    vcol = n_pairs * BLK
    w_out = w_out.at[BLK:2 * BLK, vcol:vcol + N].set(p["w_v"])
    b_out = b_out.at[vcol:vcol + N].set(p["b_v"])
    b_out = b_out.at[vcol + N:vcol + HALF].set(-1e30)

    return dict(w1=w1_aug.astype(jnp.bfloat16),
                w_h=w_h.astype(jnp.bfloat16),
                b_h=b_h,                               # f32
                w_out=w_out.astype(jnp.bfloat16),
                b_out=b_out[None, :])                  # f32


# ----------------------------------------------------------------------------
# Wrapper: pad batch, pallas_call with a pipelined batch grid, reshape back.
# ----------------------------------------------------------------------------
def _round_up(x, m):
    return ((x + m - 1) // m) * m


def _tpu_vmem_bytes():
    # Guarded trace-time query; fall back to the conservative (v7x) budget.
    try:
        return int(getattr(pltpu.get_tpu_info(), "vmem_capacity_bytes",
                           64 * 1024 * 1024))
    except Exception:
        return 64 * 1024 * 1024


def qnetwork_forward(x_dict, packed, n_actions, n_atoms, *, tile_b=4096,
                     pad_output=False):
    HALF, BLK = 64, 128
    n_pairs = (n_actions + 1) // 2
    a_even = 2 * n_pairs

    pos = x_dict["agent_pos"].astype(jnp.float32)                      # [B, 2]
    orient = x_dict["agent_orient"].astype(jnp.float32)[..., None]     # [B, 1]
    view = x_dict["local_view"].astype(jnp.float32)                    # [B, 3]
    ones = jnp.ones((pos.shape[0], 1), jnp.float32)                    # folded-bias column
    x_in = jnp.concatenate([pos, orient, view, ones], axis=-1)         # [B, 7]
    B, K = x_in.shape

    # Per-generation tile / VMEM budget:
    #   v5e/v6e (128 MiB VMEM): tiles up to 4096, 96 MB scoped limit
    #   v7x     ( 64 MiB VMEM): tiles <= 2048, 40 MB scoped limit
    big_vmem = _tpu_vmem_bytes() >= 96 * 1024 * 1024
    max_tile = 4096 if big_vmem else 2048
    vmem_limit = (96 if big_vmem else 40) * 1024 * 1024
    # Cap the tile at ceil(B/2) so the grid has >= 2 "parallel" steps whenever
    # possible (keeps both v7x TensorCores busy; negligible elsewhere).
    tb = max(8, _round_up(min(tile_b, max_tile, _round_up((B + 1) // 2, 8)), 8))
    Bp = _round_up(B, tb)
    x_pad = jnp.zeros((Bp, K), jnp.float32).at[:B].set(x_in)

    z_w = (n_pairs + 1) * BLK          # fused output-matmul width (adv pairs + value)
    out_w = n_pairs * BLK              # lane-dense 2D kernel output width

    out2d = pl.pallas_call(
        functools.partial(qnet_kernel, n_actions),
        out_shape=jax.ShapeDtypeStruct((Bp, out_w), jnp.float32),
        grid_spec=pltpu.PrefetchScalarGridSpec(
            num_scalar_prefetch=0,
            grid=(Bp // tb,),
            in_specs=[
                pl.BlockSpec((tb, K), lambda i: (i, 0)),          # x: streamed per batch tile
                pl.BlockSpec((K, BLK), lambda i: (0, 0)),         # weights: VMEM-resident
                pl.BlockSpec((BLK, 2 * BLK), lambda i: (0, 0)),
                pl.BlockSpec((1, 2 * BLK), lambda i: (0, 0)),
                pl.BlockSpec((2 * BLK, z_w), lambda i: (0, 0)),
                pl.BlockSpec((1, z_w), lambda i: (0, 0)),
            ],
            out_specs=pl.BlockSpec((tb, out_w), lambda i: (i, 0)),
        ),
        compiler_params=pltpu.CompilerParams(
            dimension_semantics=("parallel",),   # batch tiles split across TCs on v7x
            vmem_limit_bytes=vmem_limit,
        ),
    )(x_pad, packed["w1"], packed["w_h"], packed["b_h"],
      packed["w_out"], packed["b_out"])

    # [Bp, n_pairs*128] -> [Bp, A_even, 64]: pure row-major reshape, no slice copy.
    out3d = out2d.reshape(Bp, a_even, HALF)
    if pad_output:
        # Fast path: atom lanes >= n_atoms are exactly 0.0; rows >= B (and the
        # phantom action when n_actions is odd) are junk -- consumer masks/fuses.
        return out3d
    # Exact module semantics (materializes a sliced copy; prefer pad_output=True
    # on hot paths and fuse the slice into the downstream op).
    return out3d[:B, :n_actions, :n_atoms]


# ----------------------------------------------------------------------------
# Pure-JAX references.
#   qnetwork_reference      : mirrors the PyTorch forward exactly in f32.
#   qnetwork_reference_mxu  : same math at the kernel's MXU precision
#                             (bf16 operands, f32 accumulation/biases).
# ----------------------------------------------------------------------------
def _features(x_dict):
    pos = x_dict["agent_pos"].astype(jnp.float32)
    orient = x_dict["agent_orient"].astype(jnp.float32)[..., None]
    view = x_dict["local_view"].astype(jnp.float32)
    return jnp.concatenate([pos, orient, view], axis=-1)


def qnetwork_reference(x_dict, params, n_actions, n_atoms):
    x_in = _features(x_dict)
    feat = jax.nn.relu(x_in @ params["w1"] + params["b1"])
    h_adv = jax.nn.relu(feat @ params["w_ah"] + params["b_ah"])
    adv = (h_adv @ params["w_a"] + params["b_a"]).reshape(-1, n_actions, n_atoms)
    h_val = jax.nn.relu(feat @ params["w_vh"] + params["b_vh"])
    val = (h_val @ params["w_v"] + params["b_v"]).reshape(-1, 1, n_atoms)
    q = val + adv - adv.mean(axis=1, keepdims=True)
    return jax.nn.softmax(q, axis=-1)


def qnetwork_reference_mxu(x_dict, params, n_actions, n_atoms):
    bf16 = jnp.bfloat16

    def mm(a, w):
        return jnp.dot(a.astype(bf16), w.astype(bf16),
                       preferred_element_type=jnp.float32)

    x_in = _features(x_dict)
    b1 = params["b1"].astype(bf16).astype(jnp.float32)   # kernel folds b1 into bf16 w1
    feat = jax.nn.relu(mm(x_in, params["w1"]) + b1)
    h_adv = jax.nn.relu(mm(feat, params["w_ah"]) + params["b_ah"])
    adv = (mm(h_adv, params["w_a"]) + params["b_a"]).reshape(-1, n_actions, n_atoms)
    h_val = jax.nn.relu(mm(feat, params["w_vh"]) + params["b_vh"])
    val = (mm(h_val, params["w_v"]) + params["b_v"]).reshape(-1, 1, n_atoms)
    q = val + adv - adv.mean(axis=1, keepdims=True)
    return jax.nn.softmax(q, axis=-1)


if __name__ == "__main__":
    n_actions = 4     # synthetic env.action_space.n
    n_atoms = 51

    key = jax.random.PRNGKey(0)
    k_params, k_pos, k_ori, k_view = jax.random.split(key, 4)

    raw = build_params(k_params, n_actions, n_atoms, training=True)
    packed = pack_params(raw, n_actions, n_atoms)

    def make_inputs(batch, kp, ko, kv):
        return {
            "agent_pos": jax.random.uniform(kp, (batch, 2), jnp.float32, -1.0, 1.0),
            "agent_orient": jax.random.uniform(ko, (batch,), jnp.float32, 0.0, 2 * math.pi),
            "local_view": jax.random.uniform(kv, (batch, 3), jnp.float32, 0.0, 1.0),
        }

    # Primary small check (batch=2, single grid step).
    x = make_inputs(2, k_pos, k_ori, k_view)
    out = jax.block_until_ready(qnetwork_forward(x, packed, n_actions, n_atoms))
    assert out.shape == (2, n_actions, n_atoms)
    ref_mxu = qnetwork_reference_mxu(x, raw, n_actions, n_atoms)   # kernel-precision reference
    ref_f32 = qnetwork_reference(x, raw, n_actions, n_atoms)       # module-exact f32 reference
    assert jnp.allclose(out, ref_mxu, atol=1e-4, rtol=1e-4), "mismatch vs bf16-MXU reference"
    assert jnp.allclose(out, ref_f32, atol=2e-2, rtol=2e-2), "bf16 matmul drift too large"
    assert jnp.allclose(out.sum(axis=-1), 1.0, atol=1e-5), "softmax rows must sum to 1"

    # Fast-path padded output: no slice copy; padded atom lanes are exactly 0.
    out_pad = jax.block_until_ready(
        qnetwork_forward(x, packed, n_actions, n_atoms, pad_output=True))
    assert out_pad.shape[1:] == (n_actions, 64)     # n_actions=4 is even -> no phantom action
    assert jnp.all(out_pad[:2, :, n_atoms:] == 0.0), "padded atom lanes must be exactly zero"
    assert jnp.allclose(out_pad[:2, :, :n_atoms], ref_mxu, atol=1e-4, rtol=1e-4)

    # Odd batch exercises row padding and a multi-step pipelined grid (grid=3).
    k2a, k2b, k2c = jax.random.split(key, 3)
    x2 = make_inputs(20, k2a, k2b, k2c)
    out2 = jax.block_until_ready(qnetwork_forward(x2, packed, n_actions, n_atoms, tile_b=8))
    assert out2.shape == (20, n_actions, n_atoms)
    ref2 = qnetwork_reference_mxu(x2, raw, n_actions, n_atoms)
    assert jnp.allclose(out2, ref2, atol=1e-4, rtol=1e-4), "mismatch vs reference (gridded)"

    print("KERNEL_OK")
</pallas_src>

<mosaic_0001>
module attributes {stable_mosaic.version = 11 : i64} {
  func.func @qnet_kernel(%arg0: i32, %arg1: memref<8x7xf32, #tpu.memory_space<vmem>>, %arg2: memref<7x128xbf16, #tpu.memory_space<vmem>>, %arg3: memref<128x256xbf16, #tpu.memory_space<vmem>>, %arg4: memref<1x256xf32, #tpu.memory_space<vmem>>, %arg5: memref<256x384xbf16, #tpu.memory_space<vmem>>, %arg6: memref<1x384xf32, #tpu.memory_space<vmem>>, %arg7: memref<8x256xf32, #tpu.memory_space<vmem>>) attributes {dimension_semantics = [#tpu.dimension_semantics<parallel>], iteration_bounds = array<i64: 1>, scalar_prefetch = 0 : i64, scratch_operands = 0 : i64, tpu.core_type = #tpu.core_type<tc>, window_params = [{transform_indices = @transform_0, window_bounds = array<i64: 8, 7>}, {pipeline_mode = #tpu.pipeline_mode<synchronous>, transform_indices = @transform_1, window_bounds = array<i64: 7, 128>}, {pipeline_mode = #tpu.pipeline_mode<synchronous>, transform_indices = @transform_2, window_bounds = array<i64: 128, 256>}, {pipeline_mode = #tpu.pipeline_mode<synchronous>, transform_indices = @transform_3, window_bounds = array<i64: 1, 256>}, {pipeline_mode = #tpu.pipeline_mode<synchronous>, transform_indices = @transform_4, window_bounds = array<i64: 256, 384>}, {pipeline_mode = #tpu.pipeline_mode<synchronous>, transform_indices = @transform_5, window_bounds = array<i64: 1, 384>}, {transform_indices = @transform_6, window_bounds = array<i64: 8, 256>}]} {
    %c0 = arith.constant 0 : index
    %c0_0 = arith.constant 0 : index
    %0 = vector.load %arg1[%c0, %c0_0] : memref<8x7xf32, #tpu.memory_space<vmem>>, vector<8x7xf32>
    %1 = arith.truncf %0 : vector<8x7xf32> to vector<8x7xbf16>
    %c0_1 = arith.constant 0 : index
    %c0_2 = arith.constant 0 : index
    %2 = vector.load %arg2[%c0_1, %c0_2] : memref<7x128xbf16, #tpu.memory_space<vmem>>, vector<7x128xbf16>
    %cst = arith.constant dense<0.000000e+00> : vector<8x128xf32>
    %3 = tpu.matmul %1, %2, %cst {dimension_numbers = #tpu.dot_dimension_numbers<[1], [0], [0], [1], [0, 0, 1, 1], [], []>} : vector<8x7xbf16>, vector<7x128xbf16>, vector<8x128xf32> -> vector<8x128xf32>
    %cst_3 = arith.constant 0.000000e+00 : f32
    %4 = vector.broadcast %cst_3 : f32 to vector<8x128xf32>
    %5 = arith.maximumf %3, %4 : vector<8x128xf32>
    %6 = arith.truncf %5 : vector<8x128xf32> to vector<8x128xbf16>
    %c0_4 = arith.constant 0 : index
    %c0_5 = arith.constant 0 : index
    %7 = vector.load %arg3[%c0_4, %c0_5] : memref<128x256xbf16, #tpu.memory_space<vmem>>, vector<128x256xbf16>
    %cst_6 = arith.constant dense<0.000000e+00> : vector<8x256xf32>
    %8 = tpu.matmul %6, %7, %cst_6 {dimension_numbers = #tpu.dot_dimension_numbers<[1], [0], [0], [1], [0, 0, 1, 1], [], []>} : vector<8x128xbf16>, vector<128x256xbf16>, vector<8x256xf32> -> vector<8x256xf32>
    %c0_7 = arith.constant 0 : index
    %c0_8 = arith.constant 0 : index
    %9 = vector.load %arg4[%c0_7, %c0_8] : memref<1x256xf32, #tpu.memory_space<vmem>>, vector<1x256xf32>
    %10 = vector.broadcast %9 : vector<1x256xf32> to vector<8x256xf32>
    %11 = arith.addf %8, %10 : vector<8x256xf32>
    %cst_9 = arith.constant 0.000000e+00 : f32
    %12 = vector.broadcast %cst_9 : f32 to vector<8x256xf32>
    %13 = arith.maximumf %11, %12 : vector<8x256xf32>
    %14 = arith.truncf %13 : vector<8x256xf32> to vector<8x256xbf16>
    %c0_10 = arith.constant 0 : index
    %c0_11 = arith.constant 0 : index
    %15 = vector.load %arg5[%c0_10, %c0_11] : memref<256x384xbf16, #tpu.memory_space<vmem>>, vector<256x384xbf16>
    %cst_12 = arith.constant dense<0.000000e+00> : vector<8x384xf32>
    %16 = tpu.matmul %14, %15, %cst_12 {dimension_numbers = #tpu.dot_dimension_numbers<[1], [0], [0], [1], [0, 0, 1, 1], [], []>} : vector<8x256xbf16>, vector<256x384xbf16>, vector<8x384xf32> -> vector<8x384xf32>
    %c0_13 = arith.constant 0 : index
    %c0_14 = arith.constant 0 : index
    %17 = vector.load %arg6[%c0_13, %c0_14] : memref<1x384xf32, #tpu.memory_space<vmem>>, vector<1x384xf32>
    %18 = vector.broadcast %17 : vector<1x384xf32> to vector<8x384xf32>
    %19 = arith.addf %16, %18 : vector<8x384xf32>
    %20 = vector.extract_strided_slice %19 {offsets = [0, 256], sizes = [8, 128], strides = [1, 1]} : vector<8x384xf32> to vector<8x128xf32>
    %c64_i32 = arith.constant 64 : i32
    %21 = tpu.dynamic_rotate %20 by %c64_i32 dim 1 : vector<8x128xf32>, i32 -> vector<8x128xf32>
    %22 = arith.addf %20, %21 : vector<8x128xf32>
    %23 = vector.extract_strided_slice %19 {offsets = [0, 0], sizes = [8, 128], strides = [1, 1]} : vector<8x384xf32> to vector<8x128xf32>
    %24 = vector.extract_strided_slice %19 {offsets = [0, 128], sizes = [8, 128], strides = [1, 1]} : vector<8x384xf32> to vector<8x128xf32>
    %25 = arith.addf %23, %24 : vector<8x128xf32>
    %c64_i32_15 = arith.constant 64 : i32
    %26 = tpu.dynamic_rotate %25 by %c64_i32_15 dim 1 : vector<8x128xf32>, i32 -> vector<8x128xf32>
    %27 = arith.addf %25, %26 : vector<8x128xf32>
    %cst_16 = arith.constant 2.500000e-01 : f32
    %28 = vector.broadcast %cst_16 : f32 to vector<8x128xf32>
    %29 = arith.mulf %27, %28 : vector<8x128xf32>
    %30 = arith.subf %22, %29 : vector<8x128xf32>
    %31 = tpu.iota {dimensions = array<i32: 1>} : vector<1x128xi32>
    %c64_i32_17 = arith.constant 64 : i32
    %32 = vector.broadcast %c64_i32_17 : i32 to vector<1x128xi32>
    %33 = arith.cmpi slt, %31, %32 : vector<1x128xi32>
    %34 = vector.extract_strided_slice %19 {offsets = [0, 0], sizes = [8, 128], strides = [1, 1]} : vector<8x384xf32> to vector<8x128xf32>
    %35 = arith.addf %30, %34 : vector<8x128xf32>
    %cst_18 = arith.constant -1.000000e+30 : f32
    %36 = vector.shape_cast %33 : vector<1x128xi1> to vector<1x128xi1>
    %37 = vector.broadcast %36 : vector<1x128xi1> to vector<8x128xi1>
    %38 = vector.broadcast %cst_18 : f32 to vector<8x128xf32>
    %39 = arith.select %37, %35, %38 : vector<8x128xi1>, vector<8x128xf32>
    %cst_19 = arith.constant dense<0xFF800000> : vector<8xf32>
    %40 = vector.multi_reduction <maximumf>, %39, %cst_19 [1] : vector<8x128xf32> to vector<8xf32>
    %41 = vector.shape_cast %40 : vector<8xf32> to vector<8x1xf32>
    %cst_20 = arith.constant -1.000000e+30 : f32
    %42 = vector.shape_cast %33 : vector<1x128xi1> to vector<1x128xi1>
    %43 = vector.broadcast %42 : vector<1x128xi1> to vector<8x128xi1>
    %44 = vector.broadcast %cst_20 : f32 to vector<8x128xf32>
    %45 = arith.select %43, %44, %35 : vector<8x128xi1>, vector<8x128xf32>
    %cst_21 = arith.constant dense<0xFF800000> : vector<8xf32>
    %46 = vector.multi_reduction <maximumf>, %45, %cst_21 [1] : vector<8x128xf32> to vector<8xf32>
    %47 = vector.shape_cast %46 : vector<8xf32> to vector<8x1xf32>
    %48 = vector.shape_cast %33 : vector<1x128xi1> to vector<1x128xi1>
    %49 = vector.broadcast %48 : vector<1x128xi1> to vector<8x128xi1>
    %50 = vector.shape_cast %41 : vector<8x1xf32> to vector<8x1xf32>
    %51 = vector.broadcast %50 : vector<8x1xf32> to vector<8x128xf32>
    %52 = vector.shape_cast %47 : vector<8x1xf32> to vector<8x1xf32>
    %53 = vector.broadcast %52 : vector<8x1xf32> to vector<8x128xf32>
    %54 = arith.select %49, %51, %53 : vector<8x128xi1>, vector<8x128xf32>
    %55 = arith.subf %35, %54 : vector<8x128xf32>
    %56 = math.exp %55 : vector<8x128xf32>
    %cst_22 = arith.constant 0.000000e+00 : f32
    %57 = vector.shape_cast %33 : vector<1x128xi1> to vector<1x128xi1>
    %58 = vector.broadcast %57 : vector<1x128xi1> to vector<8x128xi1>
    %59 = vector.broadcast %cst_22 : f32 to vector<8x128xf32>
    %60 = arith.select %58, %56, %59 : vector<8x128xi1>, vector<8x128xf32>
    %cst_23 = arith.constant dense<0.000000e+00> : vector<8xf32>
    %61 = vector.multi_reduction <add>, %60, %cst_23 [1] : vector<8x128xf32> to vector<8xf32>
    %62 = vector.shape_cast %61 : vector<8xf32> to vector<8x1xf32>
    %cst_24 = arith.constant 0.000000e+00 : f32
    %63 = vector.shape_cast %33 : vector<1x128xi1> to vector<1x128xi1>
    %64 = vector.broadcast %63 : vector<1x128xi1> to vector<8x128xi1>
    %65 = vector.broadcast %cst_24 : f32 to vector<8x128xf32>
    %66 = arith.select %64, %65, %56 : vector<8x128xi1>, vector<8x128xf32>
    %cst_25 = arith.constant dense<0.000000e+00> : vector<8xf32>
    %67 = vector.multi_reduction <add>, %66, %cst_25 [1] : vector<8x128xf32> to vector<8xf32>
    %68 = vector.shape_cast %67 : vector<8xf32> to vector<8x1xf32>
    %69 = tpu.reciprocal %62 : vector<8x1xf32> -> vector<8x1xf32>
    %70 = tpu.reciprocal %68 : vector<8x1xf32> -> vector<8x1xf32>
    %71 = vector.shape_cast %33 : vector<1x128xi1> to vector<1x128xi1>
    %72 = vector.broadcast %71 : vector<1x128xi1> to vector<8x128xi1>
    %73 = vector.shape_cast %69 : vector<8x1xf32> to vector<8x1xf32>
    %74 = vector.broadcast %73 : vector<8x1xf32> to vector<8x128xf32>
    %75 = vector.shape_cast %70 : vector<8x1xf32> to vector<8x1xf32>
    %76 = vector.broadcast %75 : vector<8x1xf32> to vector<8x128xf32>
    %77 = arith.select %72, %74, %76 : vector<8x128xi1>, vector<8x128xf32>
    %78 = arith.mulf %56, %77 : vector<8x128xf32>
    %79 = vector.extract_strided_slice %19 {offsets = [0, 128], sizes = [8, 128], strides = [1, 1]} : vector<8x384xf32> to vector<8x128xf32>
    %80 = arith.addf %30, %79 : vector<8x128xf32>
    %cst_26 = arith.constant -1.000000e+30 : f32
    %81 = vector.shape_cast %33 : vector<1x128xi1> to vector<1x128xi1>
    %82 = vector.broadcast %81 : vector<1x128xi1> to vector<8x128xi1>
    %83 = vector.broadcast %cst_26 : f32 to vector<8x128xf32>
    %84 = arith.select %82, %80, %83 : vector<8x128xi1>, vector<8x128xf32>
    %cst_27 = arith.constant dense<0xFF800000> : vector<8xf32>
    %85 = vector.multi_reduction <maximumf>, %84, %cst_27 [1] : vector<8x128xf32> to vector<8xf32>
    %86 = vector.shape_cast %85 : vector<8xf32> to vector<8x1xf32>
    %cst_28 = arith.constant -1.000000e+30 : f32
    %87 = vector.shape_cast %33 : vector<1x128xi1> to vector<1x128xi1>
    %88 = vector.broadcast %87 : vector<1x128xi1> to vector<8x128xi1>
    %89 = vector.broadcast %cst_28 : f32 to vector<8x128xf32>
    %90 = arith.select %88, %89, %80 : vector<8x128xi1>, vector<8x128xf32>
    %cst_29 = arith.constant dense<0xFF800000> : vector<8xf32>
    %91 = vector.multi_reduction <maximumf>, %90, %cst_29 [1] : vector<8x128xf32> to vector<8xf32>
    %92 = vector.shape_cast %91 : vector<8xf32> to vector<8x1xf32>
    %93 = vector.shape_cast %33 : vector<1x128xi1> to vector<1x128xi1>
    %94 = vector.broadcast %93 : vector<1x128xi1> to vector<8x128xi1>
    %95 = vector.shape_cast %86 : vector<8x1xf32> to vector<8x1xf32>
    %96 = vector.broadcast %95 : vector<8x1xf32> to vector<8x128xf32>
    %97 = vector.shape_cast %92 : vector<8x1xf32> to vector<8x1xf32>
    %98 = vector.broadcast %97 : vector<8x1xf32> to vector<8x128xf32>
    %99 = arith.select %94, %96, %98 : vector<8x128xi1>, vector<8x128xf32>
    %100 = arith.subf %80, %99 : vector<8x128xf32>
    %101 = math.exp %100 : vector<8x128xf32>
    %cst_30 = arith.constant 0.000000e+00 : f32
    %102 = vector.shape_cast %33 : vector<1x128xi1> to vector<1x128xi1>
    %103 = vector.broadcast %102 : vector<1x128xi1> to vector<8x128xi1>
    %104 = vector.broadcast %cst_30 : f32 to vector<8x128xf32>
    %105 = arith.select %103, %101, %104 : vector<8x128xi1>, vector<8x128xf32>
    %cst_31 = arith.constant dense<0.000000e+00> : vector<8xf32>
    %106 = vector.multi_reduction <add>, %105, %cst_31 [1] : vector<8x128xf32> to vector<8xf32>
    %107 = vector.shape_cast %106 : vector<8xf32> to vector<8x1xf32>
    %cst_32 = arith.constant 0.000000e+00 : f32
    %108 = vector.shape_cast %33 : vector<1x128xi1> to vector<1x128xi1>
    %109 = vector.broadcast %108 : vector<1x128xi1> to vector<8x128xi1>
    %110 = vector.broadcast %cst_32 : f32 to vector<8x128xf32>
    %111 = arith.select %109, %110, %101 : vector<8x128xi1>, vector<8x128xf32>
    %cst_33 = arith.constant dense<0.000000e+00> : vector<8xf32>
    %112 = vector.multi_reduction <add>, %111, %cst_33 [1] : vector<8x128xf32> to vector<8xf32>
    %113 = vector.shape_cast %112 : vector<8xf32> to vector<8x1xf32>
    %114 = tpu.reciprocal %107 : vector<8x1xf32> -> vector<8x1xf32>
    %115 = tpu.reciprocal %113 : vector<8x1xf32> -> vector<8x1xf32>
    %116 = vector.shape_cast %33 : vector<1x128xi1> to vector<1x128xi1>
    %117 = vector.broadcast %116 : vector<1x128xi1> to vector<8x128xi1>
    %118 = vector.shape_cast %114 : vector<8x1xf32> to vector<8x1xf32>
    %119 = vector.broadcast %118 : vector<8x1xf32> to vector<8x128xf32>
    %120 = vector.shape_cast %115 : vector<8x1xf32> to vector<8x1xf32>
    %121 = vector.broadcast %120 : vector<8x1xf32> to vector<8x128xf32>
    %122 = arith.select %117, %119, %121 : vector<8x128xi1>, vector<8x128xf32>
    %123 = arith.mulf %101, %122 : vector<8x128xf32>
    %c0_34 = arith.constant 0 : index
    %c0_35 = arith.constant 0 : index
    %124 = vector.load %arg7[%c0_34, %c0_35] : memref<8x256xf32, #tpu.memory_space<vmem>>, vector<8x128xf32>
    tpu.vector_store %arg7[%c0_34, %c0_35], %78 {strides = array<i32>} : memref<8x256xf32, #tpu.memory_space<vmem>>, vector<8x128xf32>,
    %c0_36 = arith.constant 0 : index
    %c128 = arith.constant 128 : index
    %125 = vector.load %arg7[%c0_36, %c128] : memref<8x256xf32, #tpu.memory_space<vmem>>, vector<8x128xf32>
    tpu.vector_store %arg7[%c0_36, %c128], %123 {strides = array<i32>} : memref<8x256xf32, #tpu.memory_space<vmem>>, vector<8x128xf32>,
    return
  }
  func.func @transform_0(%arg0: i32) -> (i32, i32) {
    %c0_i32 = arith.constant 0 : i32
    %c0_i32_0 = arith.constant 0 : i32
    return %arg0, %c0_i32 : i32, i32
  }
  func.func @transform_1(%arg0: i32) -> (i32, i32) {
    %c0_i32 = arith.constant 0 : i32
    %c0_i32_0 = arith.constant 0 : i32
    %c0_i32_1 = arith.constant 0 : i32
    return %c0_i32, %c0_i32_0 : i32, i32
  }
  func.func @transform_2(%arg0: i32) -> (i32, i32) {
    %c0_i32 = arith.constant 0 : i32
    %c0_i32_0 = arith.constant 0 : i32
    %c0_i32_1 = arith.constant 0 : i32
    return %c0_i32, %c0_i32_0 : i32, i32
  }
  func.func @transform_3(%arg0: i32) -> (i32, i32) {
    %c0_i32 = arith.constant 0 : i32
    %c0_i32_0 = arith.constant 0 : i32
    %c0_i32_1 = arith.constant 0 : i32
    return %c0_i32, %c0_i32_0 : i32, i32
  }
  func.func @transform_4(%arg0: i32) -> (i32, i32) {
    %c0_i32 = arith.constant 0 : i32
    %c0_i32_0 = arith.constant 0 : i32
    %c0_i32_1 = arith.constant 0 : i32
    return %c0_i32, %c0_i32_0 : i32, i32
  }
  func.func @transform_5(%arg0: i32) -> (i32, i32) {
    %c0_i32 = arith.constant 0 : i32
    %c0_i32_0 = arith.constant 0 : i32
    %c0_i32_1 = arith.constant 0 : i32
    return %c0_i32, %c0_i32_0 : i32, i32
  }
  func.func @transform_6(%arg0: i32) -> (i32, i32) {
    %c0_i32 = arith.constant 0 : i32
    %c0_i32_0 = arith.constant 0 : i32
    return %arg0, %c0_i32 : i32, i32
  }
}

</mosaic_0001>

<llo_original>
// kernel: tpu_custom_call.1
$region0: #{tpu_custom_call.1}
  #allocation0 [shape = 'u32[]', space=smem, size = 0x4, offset = 0x4, fixed_abs, tag = 'smem constant byte address 0x4 - core index']
  #allocation1 [shape = 'u32[72,128]{1,0:T(1,128)}', space=vmem, size = 0x9000, scoped, tag = 'internal scratch']
  %s0 = inlined_call_operand.hbm [shape: f32[8,7], index: 0, kind: input, shape index: {}]
  %s1 = inlined_call_operand.hbm [shape: bf16[7,128], index: 1, kind: input, shape index: {}]
  %s2 = inlined_call_operand.hbm [shape: bf16[128,256], index: 2, kind: input, shape index: {}]
  %s3 = inlined_call_operand.hbm [shape: f32[1,256], index: 3, kind: input, shape index: {}]
  %s4 = inlined_call_operand.hbm [shape: bf16[256,384], index: 4, kind: input, shape index: {}]
  %s5 = inlined_call_operand.vmem [shape: f32[1,384], index: 5, kind: input, shape index: {}]
  %s6 = inlined_call_operand.hbm [shape: f32[8,256], index: 6, kind: output, shape index: {}]
  %s7 = sld [smem:[#allocation0]]
  $region54: #{tpu_custom_call.1} parent=0
    _
  %s9 = ssub.s32 1, %s7
  %s10 = scalar_select 0, %s9, %s7
  $region1: #{tpu_custom_call.1} parent=0
    #allocation2 [shape = 'u8[4096]{0}', space=vmem, size = 0x1000, scoped, tag = 'input window, operand 0, single buffered']
    #allocation3 [shape = 's32[1]{0}', space=sflag, size = 0x4, scoped, tag = 'scoped memory for tpu_custom_call.1']
    #allocation4 [shape = 's32[1]{0}', space=sflag, size = 0x4, scoped, tag = 'scoped memory for tpu_custom_call.1']
    #allocation5 [shape = 'u8[2048]{0}', space=vmem, size = 0x800, scoped, tag = 'input window, operand 1, single buffered']
    #allocation6 [shape = 's32[1]{0}', space=sflag, size = 0x4, scoped, tag = 'scoped memory for tpu_custom_call.1']
    #allocation7 [shape = 'u8[65536]{0}', space=vmem, size = 0x10000, scoped, tag = 'input window, operand 2, single buffered']
    #allocation8 [shape = 'u8[1024]{0}', space=vmem, size = 0x400, scoped, tag = 'input window, operand 3, single buffered']
    #allocation9 [shape = 's32[1]{0}', space=sflag, size = 0x4, scoped, tag = 'scoped memory for tpu_custom_call.1']
    #allocation10 [shape = 'u8[196608]{0}', space=vmem, size = 0x30000, scoped, tag = 'input window, operand 4, single buffered']
    #allocation11 [shape = 'u8[8192]{0}', space=vmem, size = 0x2000, scoped, tag = 'output window, operand 0, single buffered']
    %11 = vsyncpa [#allocation3], 0
    %12 = vsyncpa [#allocation6], 0
    %13 = vsyncpa [#allocation9], 0
    %14 = vsyncpa [#allocation4], 0
    // Predicated region
    $region2: #{tpu_custom_call.1} parent=1 // pred_check
      _
    $region3: #{tpu_custom_call.1} parent=1 // pred_check_branch
      %16 = sbr.rel (0) target = $region5
    $region4: #{tpu_custom_call.1} parent=1 // pred_region
      %18 = vsyncadd [#allocation3], 0
      %s20 = sshll.u32 %s0, 4
      %s21 = int_to_ptr.hbm [resolvable:$true] %s20
      %s22 = sshll.u32 [#allocation2], 4
      %s23 = int_to_ptr.vmem [resolvable:$true] %s22
      %25 = dma.hbm_to_vmem [thread:$0]  %s21, 128, %s23, [#allocation3]
    $region5: #{tpu_custom_call.1} parent=1 // pred_fallthru
      _
    // Predicated region
    $region6: #{tpu_custom_call.1} parent=1 // pred_check
      _
    $region7: #{tpu_custom_call.1} parent=1 // pred_check_branch
      %27 = sbr.rel (0) target = $region9
    $region8: #{tpu_custom_call.1} parent=1 // pred_region
      %29 = vsyncadd [#allocation6], 0
      %s31 = sshll.u32 %s1, 4
      %s32 = int_to_ptr.hbm [resolvable:$true] %s31
      %s33 = sshll.u32 [#allocation5], 4
      %s34 = int_to_ptr.vmem [resolvable:$true] %s33
      %36 = dma.hbm_to_vmem [thread:$0]  %s32, 64, %s34, [#allocation6]
    $region9: #{tpu_custom_call.1} parent=1 // pred_fallthru
      _
    // Predicated region
    $region10: #{tpu_custom_call.1} parent=1 // pred_check
      _
    $region11: #{tpu_custom_call.1} parent=1 // pred_check_branch
      %38 = sbr.rel (0) target = $region13
    $region12: #{tpu_custom_call.1} parent=1 // pred_region
      %40 = vsyncadd [#allocation6], 0
      %s41 = sshll.u32 %s2, 4
      %s42 = int_to_ptr.hbm [resolvable:$true] %s41
      %s43 = sshll.u32 [#allocation7], 4
      %s44 = int_to_ptr.vmem [resolvable:$true] %s43
      %49 = dma.hbm_to_vmem [thread:$0]  %s42, 2048, %s44, [#allocation6], 128, 128, 8
    $region13: #{tpu_custom_call.1} parent=1 // pred_fallthru
      _
    // Predicated region
    $region14: #{tpu_custom_call.1} parent=1 // pred_check
      _
    $region15: #{tpu_custom_call.1} parent=1 // pred_check_branch
      %51 = sbr.rel (0) target = $region17
    $region16: #{tpu_custom_call.1} parent=1 // pred_region
      %53 = vsyncadd [#allocation9], 0
      %s55 = sshll.u32 %s3, 4
      %s56 = int_to_ptr.hbm [resolvable:$true] %s55
      %s57 = sshll.u32 [#allocation8], 4
      %s58 = int_to_ptr.vmem [resolvable:$true] %s57
      %60 = dma.hbm_to_vmem [thread:$0]  %s56, 32, %s58, [#allocation9]
    $region17: #{tpu_custom_call.1} parent=1 // pred_fallthru
      _
    // Predicated region
    $region18: #{tpu_custom_call.1} parent=1 // pred_check
      _
    $region19: #{tpu_custom_call.1} parent=1 // pred_check_branch
      %62 = sbr.rel (0) target = $region21
    $region20: #{tpu_custom_call.1} parent=1 // pred_region
      %64 = vsyncadd [#allocation9], 0
      %s65 = sshll.u32 %s4, 4
      %s66 = int_to_ptr.hbm [resolvable:$true] %s65
      %s67 = sshll.u32 [#allocation10], 4
      %s68 = int_to_ptr.vmem [resolvable:$true] %s67
      %73 = dma.hbm_to_vmem [thread:$0]  %s66, 6144, %s68, [#allocation9], 192, 192, 12
    $region21: #{tpu_custom_call.1} parent=1 // pred_fallthru
      _
    // Predicated region
    $region22: #{tpu_custom_call.1} parent=1 // pred_check
      _
    $region23: #{tpu_custom_call.1} parent=1 // pred_check_branch
      %75 = sbr.rel (0) target = $region25
    $region24: #{tpu_custom_call.1} parent=1 // pred_region
      _
    $region25: #{tpu_custom_call.1} parent=1 // pred_fallthru
      _
    // Predicated region
    $region26: #{tpu_custom_call.1} parent=1 // pred_check
      _
    $region27: #{tpu_custom_call.1} parent=1 // pred_check_branch
      %77 = sbr.rel (0) target = $region29
    $region28: #{tpu_custom_call.1} parent=1 // pred_region
      %79 = dma.done [#allocation3], 128
    $region29: #{tpu_custom_call.1} parent=1 // pred_fallthru
      _
    // Predicated region
    $region30: #{tpu_custom_call.1} parent=1 // pred_check
      _
    $region31: #{tpu_custom_call.1} parent=1 // pred_check_branch
      %81 = sbr.rel (0) target = $region33
    $region32: #{tpu_custom_call.1} parent=1 // pred_region
      %83 = dma.done [#allocation6], 64
    $region33: #{tpu_custom_call.1} parent=1 // pred_fallthru
      _
    // Predicated region
    $region34: #{tpu_custom_call.1} parent=1 // pred_check
      _
    $region35: #{tpu_custom_call.1} parent=1 // pred_check_branch
      %85 = sbr.rel (0) target = $region37
    $region36: #{tpu_custom_call.1} parent=1 // pred_region
      %87 = dma.done [#allocation6], 2048
    $region37: #{tpu_custom_call.1} parent=1 // pred_fallthru
      _
    // Predicated region
    $region38: #{tpu_custom_call.1} parent=1 // pred_check
      _
    $region39: #{tpu_custom_call.1} parent=1 // pred_check_branch
      %89 = sbr.rel (0) target = $region41
    $region40: #{tpu_custom_call.1} parent=1 // pred_region
      %91 = dma.done [#allocation9], 32
    $region41: #{tpu_custom_call.1} parent=1 // pred_fallthru
      _
    // Predicated region
    $region42: #{tpu_custom_call.1} parent=1 // pred_check
      _
    $region43: #{tpu_custom_call.1} parent=1 // pred_check_branch
      %93 = sbr.rel (0) target = $region45
    $region44: #{tpu_custom_call.1} parent=1 // pred_region
      %95 = dma.done [#allocation9], 6144
    $region45: #{tpu_custom_call.1} parent=1 // pred_fallthru
      _
    %v97 = vld [vmem:[#allocation2] sm:$0xff]
    %v98 = vpack.c.bf16 %v97, %v97
    %v99 = vld [vmem:[#allocation5] sm:$0xf]
    %vm100 = vcmask 56320
    %v102 = vsel %vm100, %v98, 0
    %vm104 = vcmask 1042432
    %vm105 = vcmask 1043456
    %v106 = vsel %vm104, 4294967295, 65535
    %v107 = vsel %vm105, %v106, 0
    %v109 = vand.u32 %v99, %v107
    %111 = vmatpush.bf16.msra.mxu0 0
    %112 = vmatpush.bf16.msra.mxu0 0
    %113 = vmatpush.bf16.msra.mxu0 0
    %114 = vmatpush.bf16.msra.mxu0 0
    %115 = vmatpush.bf16.msra.mxu0 0
    %116 = vmatpush.bf16.msra.mxu0 0
    %117 = vmatpush.bf16.msra.mxu0 0
    %118 = vmatpush.bf16.msra.mxu0 %v109
    %119 = vmatmul.bf16.gmra.mxu0 %v102
    %v120 = vpop.f32.mrf.mxu0
    %v121 = vadd.f32 0.0, %v120
    %v122 = vpop.f32.mrf.mxu0
    %123 = vdwg.mxu0
    %v124 = vmax.f32 %v121, 0.0
    %v125 = vpack.c.bf16 %v124, %v124
    %v126 = vld [vmem:[#allocation7] sm:$0xff]
    %v127 = vld [vmem:[#allocation7 + $0x8] sm:$0xff]
    %v128 = vld [vmem:[#allocation7 + $0x10] sm:$0xff]
    %v129 = vld [vmem:[#allocation7 + $0x18] sm:$0xff]
    %v130 = vld [vmem:[#allocation7 + $0x20] sm:$0xff]
    %v131 = vld [vmem:[#allocation7 + $0x28] sm:$0xff]
    %v132 = vld [vmem:[#allocation7 + $0x30] sm:$0xff]
    %v133 = vld [vmem:[#allocation7 + $0x38] sm:$0xff]
    %v134 = vld [vmem:[#allocation7 + $0x40] sm:$0xff]
    %v135 = vld [vmem:[#allocation7 + $0x48] sm:$0xff]
    %v136 = vld [vmem:[#allocation7 + $0x50] sm:$0xff]
    %v137 = vld [vmem:[#allocation7 + $0x58] sm:$0xff]
    %v138 = vld [vmem:[#allocation7 + $0x60] sm:$0xff]
    %v139 = vld [vmem:[#allocation7 + $0x68] sm:$0xff]
    %v140 = vld [vmem:[#allocation7 + $0x70] sm:$0xff]
    %v141 = vld [vmem:[#allocation7 + $0x78] sm:$0xff]
    %v142 = vld [vmem:[#allocation8] sm:$0x3]
    %v144 = vperm.slane %v142, 0
    %v145 = vperm.slane %v142, 1
    %v164 = vunpack.c.l.b16 %v126
    %v165 = vunpack.c.h.b16 %v126
    %v166 = vunpack.c.l.b16 %v127
    %v167 = vunpack.c.h.b16 %v127
    %v168 = vunpack.c.l.b16 %v128
    %v169 = vunpack.c.h.b16 %v128
    %v170 = vunpack.c.l.b16 %v129
    %v171 = vunpack.c.h.b16 %v129
    %v172 = vunpack.c.l.b16 %v130
    %v173 = vunpack.c.h.b16 %v130
    %v174 = vunpack.c.l.b16 %v131
    %v175 = vunpack.c.h.b16 %v131
    %v176 = vunpack.c.l.b16 %v132
    %v177 = vunpack.c.h.b16 %v132
    %v178 = vunpack.c.l.b16 %v133
    %v179 = vunpack.c.h.b16 %v133
    %v180 = vunpack.c.l.b16 %v134
    %v181 = vunpack.c.h.b16 %v134
    %v182 = vunpack.c.l.b16 %v135
    %v183 = vunpack.c.h.b16 %v135
    %v184 = vunpack.c.l.b16 %v136
    %v185 = vunpack.c.h.b16 %v136
    %v186 = vunpack.c.l.b16 %v137
    %v187 = vunpack.c.h.b16 %v137
    %v188 = vunpack.c.l.b16 %v138
    %v189 = vunpack.c.h.b16 %v138
    %v190 = vunpack.c.l.b16 %v139
    %v191 = vunpack.c.h.b16 %v139
    %v192 = vunpack.c.l.b16 %v140
    %v193 = vunpack.c.h.b16 %v140
    %v194 = vunpack.c.l.b16 %v141
    %v195 = vunpack.c.h.b16 %v141
    %v196 = vpack.c.b16 %v166, %v164
    %v197 = vpack.c.b16 %v167, %v165
    %v198 = vpack.c.b16 %v170, %v168
    %v199 = vpack.c.b16 %v171, %v169
    %v200 = vpack.c.b16 %v174, %v172
    %v201 = vpack.c.b16 %v175, %v173
    %v202 = vpack.c.b16 %v178, %v176
    %v203 = vpack.c.b16 %v179, %v177
    %v204 = vpack.c.b16 %v182, %v180
    %v205 = vpack.c.b16 %v183, %v181
    %v206 = vpack.c.b16 %v186, %v184
    %v207 = vpack.c.b16 %v187, %v185
    %v208 = vpack.c.b16 %v190, %v188
    %v209 = vpack.c.b16 %v191, %v189
    %v210 = vpack.c.b16 %v194, %v192
    %v211 = vpack.c.b16 %v195, %v193
    %228 = vmatpush.bf16.msra.mxu0 %v210
    %229 = vmatpush.bf16.msra.mxu0 %v208
    %230 = vmatpush.bf16.msra.mxu0 %v206
    %231 = vmatpush.bf16.msra.mxu0 %v204
    %232 = vmatpush.bf16.msra.mxu0 %v202
    %233 = vmatpush.bf16.msra.mxu0 %v200
    %234 = vmatpush.bf16.msra.mxu0 %v198
    %235 = vmatpush.bf16.msra.mxu0 %v196
    %236 = vmatmul.bf16.gmra.mxu0 %v125
    %v237 = vpop.f32.mrf.mxu0
    %v238 = vadd.f32 %v144, %v237
    %v239 = vpop.f32.mrf.mxu0
    %240 = vdwg.mxu0
    %241 = vmatpush.bf16.msra.mxu0 %v211
    %242 = vmatpush.bf16.msra.mxu0 %v209
    %243 = vmatpush.bf16.msra.mxu0 %v207
    %244 = vmatpush.bf16.msra.mxu0 %v205
    %245 = vmatpush.bf16.msra.mxu0 %v203
    %246 = vmatpush.bf16.msra.mxu0 %v201
    %247 = vmatpush.bf16.msra.mxu0 %v199
    %248 = vmatpush.bf16.msra.mxu0 %v197
    %249 = vmatmul.bf16.gmra.mxu0 %v125
    %v250 = vpop.f32.mrf.mxu0
    %v251 = vadd.f32 %v145, %v250
    %v252 = vpop.f32.mrf.mxu0
    %253 = vdwg.mxu0
    %v254 = vmax.f32 %v238, 0.0
    %v255 = vmax.f32 %v251, 0.0
    %v256 = vpack.c.bf16 %v254, %v254
    %v257 = vpack.c.bf16 %v255, %v255
    %v258 = vld [vmem:[#allocation10] sm:$0xff]
    %v259 = vld [vmem:[#allocation10 + $0x8] sm:$0xf]
    %v260 = vld [vmem:[#allocation10 + $0xc] sm:$0xff]
    %v261 = vld [vmem:[#allocation10 + $0x14] sm:$0xf]
    %v262 = vld [vmem:[#allocation10 + $0x18] sm:$0xff]
    %v263 = vld [vmem:[#allocation10 + $0x20] sm:$0xf]
    %v264 = vld [vmem:[#allocation10 + $0x24] sm:$0xff]
    %v265 = vld [vmem:[#allocation10 + $0x2c] sm:$0xf]
    %v266 = vld [vmem:[#allocation10 + $0x30] sm:$0xff]
    %v267 = vld [vmem:[#allocation10 + $0x38] sm:$0xf]
    %v268 = vld [vmem:[#allocation10 + $0x3c] sm:$0xff]
    %v269 = vld [vmem:[#allocation10 + $0x44] sm:$0xf]
    %v270 = vld [vmem:[#allocation10 + $0x48] sm:$0xff]
    %v271 = vld [vmem:[#allocation10 + $0x50] sm:$0xf]
    %v272 = vld [vmem:[#allocation10 + $0x54] sm:$0xff]
    %v273 = vld [vmem:[#allocation10 + $0x5c] sm:$0xf]
    %v274 = vld [vmem:[#allocation10 + $0x60] sm:$0xff]
    %v275 = vld [vmem:[#allocation10 + $0x68] sm:$0xf]
    %v276 = vld [vmem:[#allocation10 + $0x6c] sm:$0xff]
    %v277 = vld [vmem:[#allocation10 + $0x74] sm:$0xf]
    %v278 = vld [vmem:[#allocation10 + $0x78] sm:$0xff]
    %v279 = vld [vmem:[#allocation10 + $0x80] sm:$0xf]
    %v280 = vld [vmem:[#allocation10 + $0x84] sm:$0xff]
    %v281 = vld [vmem:[#allocation10 + $0x8c] sm:$0xf]
    %v282 = vld [vmem:[#allocation10 + $0x90] sm:$0xff]
    %v283 = vld [vmem:[#allocation10 + $0x98] sm:$0xf]
    %v284 = vld [vmem:[#allocation10 + $0x9c] sm:$0xff]
    %v285 = vld [vmem:[#allocation10 + $0xa4] sm:$0xf]
    %v286 = vld [vmem:[#allocation10 + $0xa8] sm:$0xff]
    %v287 = vld [vmem:[#allocation10 + $0xb0] sm:$0xf]
    %v288 = vld [vmem:[#allocation10 + $0xb4] sm:$0xff]
    %v289 = vld [vmem:[#allocation10 + $0xbc] sm:$0xf]
    %v290 = vld [vmem:[#allocation10 + $0xc0] sm:$0xff]
    %v291 = vld [vmem:[#allocation10 + $0xc8] sm:$0xf]
    %v292 = vld [vmem:[#allocation10 + $0xcc] sm:$0xff]
    %v293 = vld [vmem:[#allocation10 + $0xd4] sm:$0xf]
    %v294 = vld [vmem:[#allocation10 + $0xd8] sm:$0xff]
    %v295 = vld [vmem:[#allocation10 + $0xe0] sm:$0xf]
    %v296 = vld [vmem:[#allocation10 + $0xe4] sm:$0xff]
    %v297 = vld [vmem:[#allocation10 + $0xec] sm:$0xf]
    %v298 = vld [vmem:[#allocation10 + $0xf0] sm:$0xff]
    %v299 = vld [vmem:[#allocation10 + $0xf8] sm:$0xf]
    %v300 = vld [vmem:[#allocation10 + $0xfc] sm:$0xff]
    %v301 = vld [vmem:[#allocation10 + $0x104] sm:$0xf]
    %v302 = vld [vmem:[#allocation10 + $0x108] sm:$0xff]
    %v303 = vld [vmem:[#allocation10 + $0x110] sm:$0xf]
    %v304 = vld [vmem:[#allocation10 + $0x114] sm:$0xff]
    %v305 = vld [vmem:[#allocation10 + $0x11c] sm:$0xf]
    %v306 = vld [vmem:[#allocation10 + $0x120] sm:$0xff]
    %v307 = vld [vmem:[#allocation10 + $0x128] sm:$0xf]
    %v308 = vld [vmem:[#allocation10 + $0x12c] sm:$0xff]
    %v309 = vld [vmem:[#allocation10 + $0x134] sm:$0xf]
    %v310 = vld [vmem:[#allocation10 + $0x138] sm:$0xff]
    %v311 = vld [vmem:[#allocation10 + $0x140] sm:$0xf]
    %v312 = vld [vmem:[#allocation10 + $0x144] sm:$0xff]
    %v313 = vld [vmem:[#allocation10 + $0x14c] sm:$0xf]
    %v314 = vld [vmem:[#allocation10 + $0x150] sm:$0xff]
    %v315 = vld [vmem:[#allocation10 + $0x158] sm:$0xf]
    %v316 = vld [vmem:[#allocation10 + $0x15c] sm:$0xff]
    %v317 = vld [vmem:[#allocation10 + $0x164] sm:$0xf]
    %v318 = vld [vmem:[#allocation10 + $0x168] sm:$0xff]
    %v319 = vld [vmem:[#allocation10 + $0x170] sm:$0xf]
    %v320 = vld [vmem:[#allocation10 + $0x174] sm:$0xff]
    %v321 = vld [vmem:[#allocation10 + $0x17c] sm:$0xf]
    %v322 = vld [vmem:[%s5] sm:$0x7]
    %v324 = vperm.slane %v322, 0
    %v325 = vperm.slane %v322, 1
    %v326 = vperm.slane %v322, 2
    %v394 = vunpack.c.l.b16 %v258
    %v395 = vunpack.c.h.b16 %v258
    %v396 = vunpack.c.l.b16 %v259
    %v397 = vunpack.c.l.b16 %v260
    %v398 = vunpack.c.h.b16 %v260
    %v399 = vunpack.c.l.b16 %v261
    %v400 = vunpack.c.l.b16 %v262
    %v401 = vunpack.c.h.b16 %v262
    %v402 = vunpack.c.l.b16 %v263
    %v403 = vunpack.c.l.b16 %v264
    %v404 = vunpack.c.h.b16 %v264
    %v405 = vunpack.c.l.b16 %v265
    %v406 = vunpack.c.l.b16 %v266
    %v407 = vunpack.c.h.b16 %v266
    %v408 = vunpack.c.l.b16 %v267
    %v409 = vunpack.c.l.b16 %v268
    %v410 = vunpack.c.h.b16 %v268
    %v411 = vunpack.c.l.b16 %v269
    %v412 = vunpack.c.l.b16 %v270
    %v413 = vunpack.c.h.b16 %v270
    %v414 = vunpack.c.l.b16 %v271
    %v415 = vunpack.c.l.b16 %v272
    %v416 = vunpack.c.h.b16 %v272
    %v417 = vunpack.c.l.b16 %v273
    %v418 = vunpack.c.l.b16 %v274
    %v419 = vunpack.c.h.b16 %v274
    %v420 = vunpack.c.l.b16 %v275
    %v421 = vunpack.c.l.b16 %v276
    %v422 = vunpack.c.h.b16 %v276
    %v423 = vunpack.c.l.b16 %v277
    %v424 = vunpack.c.l.b16 %v278
    %v425 = vunpack.c.h.b16 %v278
    %v426 = vunpack.c.l.b16 %v279
    %v427 = vunpack.c.l.b16 %v280
    %v428 = vunpack.c.h.b16 %v280
    %v429 = vunpack.c.l.b16 %v281
    %v430 = vunpack.c.l.b16 %v282
    %v431 = vunpack.c.h.b16 %v282
    %v432 = vunpack.c.l.b16 %v283
    %v433 = vunpack.c.l.b16 %v284
    %v434 = vunpack.c.h.b16 %v284
    %v435 = vunpack.c.l.b16 %v285
    %v436 = vunpack.c.l.b16 %v286
    %v437 = vunpack.c.h.b16 %v286
    %v438 = vunpack.c.l.b16 %v287
    %v439 = vunpack.c.l.b16 %v288
    %v440 = vunpack.c.h.b16 %v288
    %v441 = vunpack.c.l.b16 %v289
    %v442 = vunpack.c.l.b16 %v290
    %v443 = vunpack.c.h.b16 %v290
    %v444 = vunpack.c.l.b16 %v291
    %v445 = vunpack.c.l.b16 %v292
    %v446 = vunpack.c.h.b16 %v292
    %v447 = vunpack.c.l.b16 %v293
    %v448 = vunpack.c.l.b16 %v294
    %v449 = vunpack.c.h.b16 %v294
    %v450 = vunpack.c.l.b16 %v295
    %v451 = vunpack.c.l.b16 %v296
    %v452 = vunpack.c.h.b16 %v296
    %v453 = vunpack.c.l.b16 %v297
    %v454 = vunpack.c.l.b16 %v298
    %v455 = vunpack.c.h.b16 %v298
    %v456 = vunpack.c.l.b16 %v299
    %v457 = vunpack.c.l.b16 %v300
    %v458 = vunpack.c.h.b16 %v300
    %v459 = vunpack.c.l.b16 %v301
    %v460 = vunpack.c.l.b16 %v302
    %v461 = vunpack.c.h.b16 %v302
    %v462 = vunpack.c.l.b16 %v303
    %v463 = vunpack.c.l.b16 %v304
    %v464 = vunpack.c.h.b16 %v304
    %v465 = vunpack.c.l.b16 %v305
    %v466 = vunpack.c.l.b16 %v306
    %v467 = vunpack.c.h.b16 %v306
    %v468 = vunpack.c.l.b16 %v307
    %v469 = vunpack.c.l.b16 %v308
    %v470 = vunpack.c.h.b16 %v308
    %v471 = vunpack.c.l.b16 %v309
    %v472 = vunpack.c.l.b16 %v310
    %v473 = vunpack.c.h.b16 %v310
    %v474 = vunpack.c.l.b16 %v311
    %v475 = vunpack.c.l.b16 %v312
    %v476 = vunpack.c.h.b16 %v312
    %v477 = vunpack.c.l.b16 %v313
    %v478 = vunpack.c.l.b16 %v314
    %v479 = vunpack.c.h.b16 %v314
    %v480 = vunpack.c.l.b16 %v315
    %v481 = vunpack.c.l.b16 %v316
    %v482 = vunpack.c.h.b16 %v316
    %v483 = vunpack.c.l.b16 %v317
    %v484 = vunpack.c.l.b16 %v318
    %v485 = vunpack.c.h.b16 %v318
    %v486 = vunpack.c.l.b16 %v319
    %v487 = vunpack.c.l.b16 %v320
    %v488 = vunpack.c.h.b16 %v320
    %v489 = vunpack.c.l.b16 %v321
    %v490 = vpack.c.b16 %v397, %v394
    %v491 = vpack.c.b16 %v398, %v395
    %v492 = vpack.c.b16 %v399, %v396
    %v493 = vpack.c.b16 %v403, %v400
    %v494 = vpack.c.b16 %v404, %v401
    %v495 = vpack.c.b16 %v405, %v402
    %v496 = vpack.c.b16 %v409, %v406
    %v497 = vpack.c.b16 %v410, %v407
    %v498 = vpack.c.b16 %v411, %v408
    %v499 = vpack.c.b16 %v415, %v412
    %v500 = vpack.c.b16 %v416, %v413
    %v501 = vpack.c.b16 %v417, %v414
    %v502 = vpack.c.b16 %v421, %v418
    %v503 = vpack.c.b16 %v422, %v419
    %v504 = vpack.c.b16 %v423, %v420
    %v505 = vpack.c.b16 %v427, %v424
    %v506 = vpack.c.b16 %v428, %v425
    %v507 = vpack.c.b16 %v429, %v426
    %v508 = vpack.c.b16 %v433, %v430
    %v509 = vpack.c.b16 %v434, %v431
    %v510 = vpack.c.b16 %v435, %v432
    %v511 = vpack.c.b16 %v439, %v436
    %v512 = vpack.c.b16 %v440, %v437
    %v513 = vpack.c.b16 %v441, %v438
    %v514 = vpack.c.b16 %v445, %v442
    %v515 = vpack.c.b16 %v446, %v443
    %v516 = vpack.c.b16 %v447, %v444
    %v517 = vpack.c.b16 %v451, %v448
    %v518 = vpack.c.b16 %v452, %v449
    %v519 = vpack.c.b16 %v453, %v450
    %v520 = vpack.c.b16 %v457, %v454
    %v521 = vpack.c.b16 %v458, %v455
    %v522 = vpack.c.b16 %v459, %v456
    %v523 = vpack.c.b16 %v463, %v460
    %v524 = vpack.c.b16 %v464, %v461
    %v525 = vpack.c.b16 %v465, %v462
    %v526 = vpack.c.b16 %v469, %v466
    %v527 = vpack.c.b16 %v470, %v467
    %v528 = vpack.c.b16 %v471, %v468
    %v529 = vpack.c.b16 %v475, %v472
    %v530 = vpack.c.b16 %v476, %v473
    %v531 = vpack.c.b16 %v477, %v474
    %v532 = vpack.c.b16 %v481, %v478
    %v533 = vpack.c.b16 %v482, %v479
    %v534 = vpack.c.b16 %v483, %v480
    %v535 = vpack.c.b16 %v487, %v484
    %v536 = vpack.c.b16 %v488, %v485
    %v537 = vpack.c.b16 %v489, %v486
    %586 = vmatpush.bf16.msra.mxu0 %v511
    %587 = vmatpush.bf16.msra.mxu0 %v508
    %588 = vmatpush.bf16.msra.mxu0 %v505
    %589 = vmatpush.bf16.msra.mxu0 %v502
    %590 = vmatpush.bf16.msra.mxu0 %v499
    %591 = vmatpush.bf16.msra.mxu0 %v496
    %592 = vmatpush.bf16.msra.mxu0 %v493
    %593 = vmatpush.bf16.msra.mxu0 %v490
    %594 = vmatmul.bf16.gmra.mxu0 %v256
    %v595 = vpop.f32.mrf.mxu0
    %v596 = vadd.f32 %v324, %v595
    %v597 = vpop.f32.mrf.mxu0
    %598 = vdwg.mxu0
    %599 = vmatpush.bf16.msra.mxu0 %v535
    %600 = vmatpush.bf16.msra.mxu0 %v532
    %601 = vmatpush.bf16.msra.mxu0 %v529
    %602 = vmatpush.bf16.msra.mxu0 %v526
    %603 = vmatpush.bf16.msra.mxu0 %v523
    %604 = vmatpush.bf16.msra.mxu0 %v520
    %605 = vmatpush.bf16.msra.mxu0 %v517
    %606 = vmatpush.bf16.msra.mxu0 %v514
    %607 = vmatmul.bf16.gmra.mxu0 %v257
    %v608 = vpop.f32.mrf.mxu0
    %v609 = vadd.f32 %v596, %v608
    %v610 = vpop.f32.mrf.mxu0
    %611 = vdwg.mxu0
    %612 = vmatpush.bf16.msra.mxu0 %v512
    %613 = vmatpush.bf16.msra.mxu0 %v509
    %614 = vmatpush.bf16.msra.mxu0 %v506
    %615 = vmatpush.bf16.msra.mxu0 %v503
    %616 = vmatpush.bf16.msra.mxu0 %v500
    %617 = vmatpush.bf16.msra.mxu0 %v497
    %618 = vmatpush.bf16.msra.mxu0 %v494
    %619 = vmatpush.bf16.msra.mxu0 %v491
    %620 = vmatmul.bf16.gmra.mxu0 %v256
    %v621 = vpop.f32.mrf.mxu0
    %v622 = vadd.f32 %v325, %v621
    %v623 = vpop.f32.mrf.mxu0
    %624 = vdwg.mxu0
    %625 = vmatpush.bf16.msra.mxu0 %v536
    %626 = vmatpush.bf16.msra.mxu0 %v533
    %627 = vmatpush.bf16.msra.mxu0 %v530
    %628 = vmatpush.bf16.msra.mxu0 %v527
    %629 = vmatpush.bf16.msra.mxu0 %v524
    %630 = vmatpush.bf16.msra.mxu0 %v521
    %631 = vmatpush.bf16.msra.mxu0 %v518
    %632 = vmatpush.bf16.msra.mxu0 %v515
    %633 = vmatmul.bf16.gmra.mxu0 %v257
    %v634 = vpop.f32.mrf.mxu0
    %v635 = vadd.f32 %v622, %v634
    %v636 = vpop.f32.mrf.mxu0
    %637 = vdwg.mxu0
    %638 = vmatpush.bf16.msra.mxu0 %v513
    %639 = vmatpush.bf16.msra.mxu0 %v510
    %640 = vmatpush.bf16.msra.mxu0 %v507
    %641 = vmatpush.bf16.msra.mxu0 %v504
    %642 = vmatpush.bf16.msra.mxu0 %v501
    %643 = vmatpush.bf16.msra.mxu0 %v498
    %644 = vmatpush.bf16.msra.mxu0 %v495
    %645 = vmatpush.bf16.msra.mxu0 %v492
    %646 = vmatmul.bf16.gmra.mxu0 %v256
    %v647 = vpop.f32.mrf.mxu0
    %v648 = vadd.f32 %v326, %v647
    %v649 = vpop.f32.mrf.mxu0
    %650 = vdwg.mxu0
    %651 = vmatpush.bf16.msra.mxu0 %v537
    %652 = vmatpush.bf16.msra.mxu0 %v534
    %653 = vmatpush.bf16.msra.mxu0 %v531
    %654 = vmatpush.bf16.msra.mxu0 %v528
    %655 = vmatpush.bf16.msra.mxu0 %v525
    %656 = vmatpush.bf16.msra.mxu0 %v522
    %657 = vmatpush.bf16.msra.mxu0 %v519
    %658 = vmatpush.bf16.msra.mxu0 %v516
    %659 = vmatmul.bf16.gmra.mxu0 %v257
    %v660 = vpop.f32.mrf.mxu0
    %v661 = vadd.f32 %v648, %v660
    %v662 = vpop.f32.mrf.mxu0
    %663 = vdwg.mxu0
    %664 = vrot.lane.b32.xlu0 %v661, 64
    %v665 = vpop.permute.xlu0 %664
    %v666 = vadd.f32 %v661, %v665
    %v667 = vadd.f32 %v609, %v635
    %668 = vrot.lane.b32.xlu0 %v667, 64
    %v669 = vpop.permute.xlu0 %668
    %v670 = vadd.f32 %v667, %v669
    %v671 = vmul.f32 %v670, 0.25
    %v672 = vsub.f32 %v666, %v671
    %v673 = vlaneseq
    %v674 = vand.u32 %v673, 127
    %vm675 = vcmp.lt.s32.totalorder %v674, 64
    %v676 = vadd.f32 %v672, %v609
    %v677 = vsel %vm675, 1, 0
    %vm678 = vcmp.eq.s32.totalorder %v677, 1
    %v679 = vsel %vm678, %v676, -1e+30
    %680 = vmax.xlane.f32.xlu0 %v679
    %v681 = vpop.xlane.xlu0 %680
    %v682 = vsel %vm678, -1e+30, %v676
    %683 = vmax.xlane.f32.xlu0 %v682
    %v684 = vpop.xlane.xlu0 %683
    %v685 = vsel %vm678, %v681, %v684
    %v686 = vsub.f32 %v676, %v685
    %v687 = vmul.f32 %v686, 1.442695
    %v688 = vpow.pop %v687
    %v689 = vsel %vm678, %v688, 0.0
    %690 = vadd.xlane.f32.xlu0 %v689
    %v691 = vpop.xlane.xlu0 %690
    %v692 = vsel %vm678, 0.0, %v688
    %693 = vadd.xlane.f32.xlu0 %v692
    %v694 = vpop.xlane.xlu0 %693
    %v695 = vrcp.pop %v691
    %v696 = vmul.f32 %v691, %v695
    %v697 = vsub.f32 1.0, %v696
    %v698 = vmul.f32 %v695, %v697
    %v699 = vadd.f32 %v695, %v698
    %vm700 = vweird.f32 %v691
    %vm701 = vweird.f32 %v695
    %vm702 = vmor %vm700, %vm701
    %v703 = vsel %vm702, %v695, %v699
    %v704 = vand.u32 2147483647, %v691
    %vm705 = vcmp.eq.f32.partialorder %v704, 8.507059e+37
    %v706 = vand.u32 %v691, 2147483648
    %v707 = vor.u32 1.1754944e-38, %v706
    %v708 = vsel %vm705, %v707, %v703
    %v709 = vrcp.pop %v694
    %v710 = vmul.f32 %v694, %v709
    %v711 = vsub.f32 1.0, %v710
    %v712 = vmul.f32 %v709, %v711
    %v713 = vadd.f32 %v709, %v712
    %vm714 = vweird.f32 %v694
    %vm715 = vweird.f32 %v709
    %vm716 = vmor %vm714, %vm715
    %v717 = vsel %vm716, %v709, %v713
    %v718 = vand.u32 2147483647, %v694
    %vm719 = vcmp.eq.f32.partialorder %v718, 8.507059e+37
    %v720 = vand.u32 %v694, 2147483648
    %v721 = vor.u32 1.1754944e-38, %v720
    %v722 = vsel %vm719, %v721, %v717
    %v723 = vsel %vm678, %v708, %v722
    %v724 = vmul.f32 %v688, %v723
    %v725 = vadd.f32 %v672, %v635
    %v726 = vsel %vm678, %v725, -1e+30
    %727 = vmax.xlane.f32.xlu0 %v726
    %v728 = vpop.xlane.xlu0 %727
    %v729 = vsel %vm678, -1e+30, %v725
    %730 = vmax.xlane.f32.xlu0 %v729
    %v731 = vpop.xlane.xlu0 %730
    %v732 = vsel %vm678, %v728, %v731
    %v733 = vsub.f32 %v725, %v732
    %v734 = vmul.f32 %v733, 1.442695
    %v735 = vpow.pop %v734
    %v736 = vsel %vm678, %v735, 0.0
    %737 = vadd.xlane.f32.xlu0 %v736
    %v738 = vpop.xlane.xlu0 %737
    %v739 = vsel %vm678, 0.0, %v735
    %740 = vadd.xlane.f32.xlu0 %v739
    %v741 = vpop.xlane.xlu0 %740
    %v742 = vrcp.pop %v738
    %v743 = vmul.f32 %v738, %v742
    %v744 = vsub.f32 1.0, %v743
    %v745 = vmul.f32 %v742, %v744
    %v746 = vadd.f32 %v742, %v745
    %vm747 = vweird.f32 %v738
    %vm748 = vweird.f32 %v742
    %vm749 = vmor %vm747, %vm748
    %v750 = vsel %vm749, %v742, %v746
    %v751 = vand.u32 2147483647, %v738
    %vm752 = vcmp.eq.f32.partialorder %v751, 8.507059e+37
    %v753 = vand.u32 %v738, 2147483648
    %v754 = vor.u32 1.1754944e-38, %v753
    %v755 = vsel %vm752, %v754, %v750
    %v756 = vrcp.pop %v741
    %v757 = vmul.f32 %v741, %v756
    %v758 = vsub.f32 1.0, %v757
    %v759 = vmul.f32 %v756, %v758
    %v760 = vadd.f32 %v756, %v759
    %vm761 = vweird.f32 %v741
    %vm762 = vweird.f32 %v756
    %vm763 = vmor %vm761, %vm762
    %v764 = vsel %vm763, %v756, %v760
    %v765 = vand.u32 2147483647, %v741
    %vm766 = vcmp.eq.f32.partialorder %v765, 8.507059e+37
    %v767 = vand.u32 %v741, 2147483648
    %v768 = vor.u32 1.1754944e-38, %v767
    %v769 = vsel %vm766, %v768, %v764
    %v770 = vsel %vm678, %v755, %v769
    %v771 = vmul.f32 %v735, %v770
    %772 = vst [vmem:[#allocation11] sm:$0xff] %v724
    %773 = vst [vmem:[#allocation11 + $0x8] sm:$0xff] %v771
    // Predicated region
    $region46: #{tpu_custom_call.1} parent=1 // pred_check
      _
    $region47: #{tpu_custom_call.1} parent=1 // pred_check_branch
      %775 = sbr.rel (0) target = $region49
    $region48: #{tpu_custom_call.1} parent=1 // pred_region
      %777 = vsyncadd [#allocation4], 0
      %s779 = sshll.u32 [#allocation11], 4
      %s780 = int_to_ptr.vmem [resolvable:$true] %s779
      %s781 = sshll.u32 %s6, 4
      %s782 = int_to_ptr.hbm [resolvable:$true] %s781
      %784 = dma.vmem_to_hbm [thread:$0]  %s780, 256, %s782, [#allocation4]
    $region49: #{tpu_custom_call.1} parent=1 // pred_fallthru
      _
    // Predicated region
    $region50: #{tpu_custom_call.1} parent=1 // pred_check
      _
    $region51: #{tpu_custom_call.1} parent=1 // pred_check_branch
      %786 = sbr.rel (0) target = $region53
    $region52: #{tpu_custom_call.1} parent=1 // pred_region
      %788 = dma.done [#allocation4], 256
    $region53: #{tpu_custom_call.1} parent=1 // pred_fallthru
      _
    %789 = vsyncpa [#allocation3], 1
    %790 = vsyncpa [#allocation6], 1
    %791 = vsyncpa [#allocation9], 1
    %792 = vsyncpa [#allocation4], 1

</llo_original>
